<compile_context>
chip_gen: v6e
topology: v6e:2x2x1
jax: 0.10.0
libtpu: 0.0.40
codegen_flags: <defaults>
</compile_context>

<pallas_src>
import functools

import jax
import jax.numpy as jnp
from jax.experimental import pallas as pl
from jax.experimental.pallas import tpu as pltpu


def _round_up(x, m):
    return ((x + m - 1) // m) * m


def _decoder_kernel(z_ref, w1_ref, b1_ref, w2_ref, b2_ref, w3_ref, b3_ref,
                    out_ref):
    """Fused 3-layer MLP: (Linear -> LeakyReLU) x2 -> Linear, f32 accumulate."""

    def linear(x, w_ref, b_ref):
        # Cast activations to the (pre-cast) weight dtype for the MXU; always
        # accumulate in f32.  Bias add stays f32 on the VPU.
        y = jnp.dot(x.astype(w_ref.dtype), w_ref[...],
                    preferred_element_type=jnp.float32)
        return y + b_ref[...]          # bias is (1, D) -> broadcast over rows

    def leaky_relu(x):
        return jnp.maximum(x, 0.01 * x)   # single max (slope < 1), no select

    h = leaky_relu(linear(z_ref[...], w1_ref, b1_ref))
    h = leaky_relu(linear(h, w2_ref, b2_ref))
    out_ref[...] = linear(h, w3_ref, b3_ref).astype(out_ref.dtype)


def prepare_decoder_params(params, matmul_dtype=jnp.bfloat16):
    """One-time prep (hoisted out of the hot path): cast weights to the MXU
    input dtype and reshape biases to (1, D) f32."""
    D = params["w1"].shape[1]
    return {
        "w1": params["w1"].astype(matmul_dtype),
        "w2": params["w2"].astype(matmul_dtype),
        "w3": params["w3"].astype(matmul_dtype),
        "b1": params["b1"].astype(jnp.float32).reshape(1, D),
        "b2": params["b2"].astype(jnp.float32).reshape(1, D),
        "b3": params["b3"].astype(jnp.float32).reshape(1, D),
    }


def decoder_forward(z, prepped, *, tile_b=1024):
    """Fused 3-layer MLP decoder.

    z:       (B, latent_dim) float32
    prepped: output of prepare_decoder_params (weights (in, out), biases (1, D))
    Returns (x_hat (B, D) float32, scalar 0.75) mirroring the PyTorch module.
    """
    B, L = z.shape
    D = prepped["w1"].shape[1]

    # Batch tile: multiple of 8 (sublane rule), as large as useful, and — for
    # mid/large batches — small enough that the grid has >= 2 steps so the
    # "parallel" axis shards across both v7x TensorCores.
    tb = max(8, min(tile_b, _round_up(B, 8)))
    if B > 16 and pl.cdiv(B, tb) < 2:
        tb = max(8, _round_up(pl.cdiv(B, 2), 8))
    grid = (pl.cdiv(B, tb),)

    # Weights / biases: constant index_map -> resident in VMEM across all steps.
    resident = lambda shape: pl.BlockSpec(shape, lambda i: (0, 0))

    x_hat = pl.pallas_call(
        _decoder_kernel,
        out_shape=jax.ShapeDtypeStruct((B, D), jnp.float32),
        grid=grid,
        in_specs=[
            pl.BlockSpec((tb, L), lambda i: (i, 0)),   # z: tiled over batch
            resident((L, D)),                          # w1
            resident((1, D)),                          # b1
            resident((D, D)),                          # w2
            resident((1, D)),                          # b2
            resident((D, D)),                          # w3
            resident((1, D)),                          # b3
        ],
        out_specs=pl.BlockSpec((tb, D), lambda i: (i, 0)),
        compiler_params=pltpu.CompilerParams(
            dimension_semantics=("parallel",)),        # megacore / 2 TCs on v7x
    )(z, prepped["w1"], prepped["b1"], prepped["w2"], prepped["b2"],
      prepped["w3"], prepped["b3"])

    return x_hat, jnp.float32(0.75)


def init_decoder_params(key, latent_dim, original_dim):
    """Deterministic init matching the shapes of the PyTorch module.

    PyTorch nn.Linear stores weight as (out, in); we store the transpose
    (in, out) so the kernel computes x @ W directly.
    """
    k1, k2, k3, k4, k5, k6 = jax.random.split(key, 6)

    def uniform_init(k, shape, fan_in):
        bound = 1.0 / jnp.sqrt(fan_in)
        return jax.random.uniform(k, shape, jnp.float32, -bound, bound)

    return {
        "w1": uniform_init(k1, (latent_dim, original_dim), latent_dim),
        "b1": uniform_init(k2, (original_dim,), latent_dim),
        "w2": uniform_init(k3, (original_dim, original_dim), original_dim),
        "b2": uniform_init(k4, (original_dim,), original_dim),
        "w3": uniform_init(k5, (original_dim, original_dim), original_dim),
        "b3": uniform_init(k6, (original_dim,), original_dim),
    }


def _reference_forward(z, params):
    """Plain-JAX reference of the PyTorch forward for sanity checking."""
    h = z @ params["w1"] + params["b1"]
    h = jnp.where(h > 0, h, 0.01 * h)
    h = h @ params["w2"] + params["b2"]
    h = jnp.where(h > 0, h, 0.01 * h)
    h = h @ params["w3"] + params["b3"]
    return h


if __name__ == "__main__":
    key = jax.random.PRNGKey(0)
    k_param, k_data = jax.random.split(key)

    batch = 8
    latent_dim = 32
    original_dim = 64

    params = init_decoder_params(k_param, latent_dim, original_dim)
    z = jax.random.normal(k_data, (batch, latent_dim), jnp.float32)

    x_ref = _reference_forward(z, params)

    # f32 MXU path: tight tolerance.
    prepped_f32 = prepare_decoder_params(params, jnp.float32)
    fwd = jax.jit(functools.partial(decoder_forward, tile_b=1024))
    x_hat, const = fwd(z, prepped_f32)
    x_hat = jax.block_until_ready(x_hat)
    const = jax.block_until_ready(const)

    assert x_hat.shape == (batch, original_dim)
    assert jnp.allclose(x_hat, x_ref, atol=1e-4, rtol=1e-4)
    assert abs(float(const) - 0.75) < 1e-7

    # bf16 MXU path (default for prod on v5e/v6e/v7x): looser tolerance.
    prepped_bf16 = prepare_decoder_params(params, jnp.bfloat16)
    x_bf16, _ = fwd(z, prepped_bf16)
    x_bf16 = jax.block_until_ready(x_bf16)
    assert x_bf16.shape == (batch, original_dim)
    assert jnp.allclose(x_bf16, x_ref, atol=5e-2, rtol=5e-2)

    print("KERNEL_OK")
</pallas_src>

<mosaic_0001>
module attributes {stable_mosaic.version = 11 : i64} {
  func.func @_decoder_kernel(%arg0: i32, %arg1: memref<8x32xf32, #tpu.memory_space<vmem>>, %arg2: memref<32x64xf32, #tpu.memory_space<vmem>>, %arg3: memref<1x64xf32, #tpu.memory_space<vmem>>, %arg4: memref<64x64xf32, #tpu.memory_space<vmem>>, %arg5: memref<1x64xf32, #tpu.memory_space<vmem>>, %arg6: memref<64x64xf32, #tpu.memory_space<vmem>>, %arg7: memref<1x64xf32, #tpu.memory_space<vmem>>, %arg8: memref<8x64xf32, #tpu.memory_space<vmem>>) attributes {dimension_semantics = [#tpu.dimension_semantics<parallel>], iteration_bounds = array<i64: 1>, scalar_prefetch = 0 : i64, scratch_operands = 0 : i64, tpu.core_type = #tpu.core_type<tc>, window_params = [{transform_indices = @transform_0, window_bounds = array<i64: 8, 32>}, {pipeline_mode = #tpu.pipeline_mode<synchronous>, transform_indices = @transform_1, window_bounds = array<i64: 32, 64>}, {pipeline_mode = #tpu.pipeline_mode<synchronous>, transform_indices = @transform_2, window_bounds = array<i64: 1, 64>}, {pipeline_mode = #tpu.pipeline_mode<synchronous>, transform_indices = @transform_3, window_bounds = array<i64: 64, 64>}, {pipeline_mode = #tpu.pipeline_mode<synchronous>, transform_indices = @transform_4, window_bounds = array<i64: 1, 64>}, {pipeline_mode = #tpu.pipeline_mode<synchronous>, transform_indices = @transform_5, window_bounds = array<i64: 64, 64>}, {pipeline_mode = #tpu.pipeline_mode<synchronous>, transform_indices = @transform_6, window_bounds = array<i64: 1, 64>}, {transform_indices = @transform_7, window_bounds = array<i64: 8, 64>}]} {
    %c0 = arith.constant 0 : index
    %c0_0 = arith.constant 0 : index
    %0 = vector.load %arg1[%c0, %c0_0] : memref<8x32xf32, #tpu.memory_space<vmem>>, vector<8x32xf32>
    %c0_1 = arith.constant 0 : index
    %c0_2 = arith.constant 0 : index
    %1 = vector.load %arg2[%c0_1, %c0_2] : memref<32x64xf32, #tpu.memory_space<vmem>>, vector<32x64xf32>
    %cst = arith.constant dense<0.000000e+00> : vector<8x64xf32>
    %2 = tpu.matmul %0, %1, %cst {dimension_numbers = #tpu.dot_dimension_numbers<[1], [0], [0], [1], [0, 0, 1, 1], [], []>} : vector<8x32xf32>, vector<32x64xf32>, vector<8x64xf32> -> vector<8x64xf32>
    %c0_3 = arith.constant 0 : index
    %c0_4 = arith.constant 0 : index
    %3 = vector.load %arg3[%c0_3, %c0_4] : memref<1x64xf32, #tpu.memory_space<vmem>>, vector<1x64xf32>
    %4 = vector.broadcast %3 : vector<1x64xf32> to vector<8x64xf32>
    %5 = arith.addf %2, %4 : vector<8x64xf32>
    %cst_5 = arith.constant 0.00999999977 : f32
    %6 = vector.broadcast %cst_5 : f32 to vector<8x64xf32>
    %7 = arith.mulf %6, %5 : vector<8x64xf32>
    %8 = arith.maximumf %5, %7 : vector<8x64xf32>
    %c0_6 = arith.constant 0 : index
    %c0_7 = arith.constant 0 : index
    %9 = vector.load %arg4[%c0_6, %c0_7] : memref<64x64xf32, #tpu.memory_space<vmem>>, vector<64x64xf32>
    %cst_8 = arith.constant dense<0.000000e+00> : vector<8x64xf32>
    %10 = tpu.matmul %8, %9, %cst_8 {dimension_numbers = #tpu.dot_dimension_numbers<[1], [0], [0], [1], [0, 0, 1, 1], [], []>} : vector<8x64xf32>, vector<64x64xf32>, vector<8x64xf32> -> vector<8x64xf32>
    %c0_9 = arith.constant 0 : index
    %c0_10 = arith.constant 0 : index
    %11 = vector.load %arg5[%c0_9, %c0_10] : memref<1x64xf32, #tpu.memory_space<vmem>>, vector<1x64xf32>
    %12 = vector.broadcast %11 : vector<1x64xf32> to vector<8x64xf32>
    %13 = arith.addf %10, %12 : vector<8x64xf32>
    %cst_11 = arith.constant 0.00999999977 : f32
    %14 = vector.broadcast %cst_11 : f32 to vector<8x64xf32>
    %15 = arith.mulf %14, %13 : vector<8x64xf32>
    %16 = arith.maximumf %13, %15 : vector<8x64xf32>
    %c0_12 = arith.constant 0 : index
    %c0_13 = arith.constant 0 : index
    %17 = vector.load %arg6[%c0_12, %c0_13] : memref<64x64xf32, #tpu.memory_space<vmem>>, vector<64x64xf32>
    %cst_14 = arith.constant dense<0.000000e+00> : vector<8x64xf32>
    %18 = tpu.matmul %16, %17, %cst_14 {dimension_numbers = #tpu.dot_dimension_numbers<[1], [0], [0], [1], [0, 0, 1, 1], [], []>} : vector<8x64xf32>, vector<64x64xf32>, vector<8x64xf32> -> vector<8x64xf32>
    %c0_15 = arith.constant 0 : index
    %c0_16 = arith.constant 0 : index
    %19 = vector.load %arg7[%c0_15, %c0_16] : memref<1x64xf32, #tpu.memory_space<vmem>>, vector<1x64xf32>
    %20 = vector.broadcast %19 : vector<1x64xf32> to vector<8x64xf32>
    %21 = arith.addf %18, %20 : vector<8x64xf32>
    %c0_17 = arith.constant 0 : index
    %c0_18 = arith.constant 0 : index
    %22 = vector.load %arg8[%c0_17, %c0_18] : memref<8x64xf32, #tpu.memory_space<vmem>>, vector<8x64xf32>
    tpu.vector_store %arg8[%c0_17, %c0_18], %21 {strides = array<i32>} : memref<8x64xf32, #tpu.memory_space<vmem>>, vector<8x64xf32>,
    return
  }
  func.func @transform_0(%arg0: i32) -> (i32, i32) {
    %c0_i32 = arith.constant 0 : i32
    %c0_i32_0 = arith.constant 0 : i32
    return %arg0, %c0_i32 : i32, i32
  }
  func.func @transform_1(%arg0: i32) -> (i32, i32) {
    %c0_i32 = arith.constant 0 : i32
    %c0_i32_0 = arith.constant 0 : i32
    %c0_i32_1 = arith.constant 0 : i32
    return %c0_i32, %c0_i32_0 : i32, i32
  }
  func.func @transform_2(%arg0: i32) -> (i32, i32) {
    %c0_i32 = arith.constant 0 : i32
    %c0_i32_0 = arith.constant 0 : i32
    %c0_i32_1 = arith.constant 0 : i32
    return %c0_i32, %c0_i32_0 : i32, i32
  }
  func.func @transform_3(%arg0: i32) -> (i32, i32) {
    %c0_i32 = arith.constant 0 : i32
    %c0_i32_0 = arith.constant 0 : i32
    %c0_i32_1 = arith.constant 0 : i32
    return %c0_i32, %c0_i32_0 : i32, i32
  }
  func.func @transform_4(%arg0: i32) -> (i32, i32) {
    %c0_i32 = arith.constant 0 : i32
    %c0_i32_0 = arith.constant 0 : i32
    %c0_i32_1 = arith.constant 0 : i32
    return %c0_i32, %c0_i32_0 : i32, i32
  }
  func.func @transform_5(%arg0: i32) -> (i32, i32) {
    %c0_i32 = arith.constant 0 : i32
    %c0_i32_0 = arith.constant 0 : i32
    %c0_i32_1 = arith.constant 0 : i32
    return %c0_i32, %c0_i32_0 : i32, i32
  }
  func.func @transform_6(%arg0: i32) -> (i32, i32) {
    %c0_i32 = arith.constant 0 : i32
    %c0_i32_0 = arith.constant 0 : i32
    %c0_i32_1 = arith.constant 0 : i32
    return %c0_i32, %c0_i32_0 : i32, i32
  }
  func.func @transform_7(%arg0: i32) -> (i32, i32) {
    %c0_i32 = arith.constant 0 : i32
    %c0_i32_0 = arith.constant 0 : i32
    return %arg0, %c0_i32 : i32, i32
  }
}

</mosaic_0001>

<llo_original>
// kernel: decoder_forward.1
$region0: #{decoder_forward.1}
  #allocation0 [shape = 'u32[]', space=smem, size = 0x4, offset = 0x4, fixed_abs, tag = 'smem constant byte address 0x4 - core index']
  #allocation1 [shape = 'u32[144,128]{1,0:T(1,128)}', space=vmem, size = 0x12000, scoped, tag = 'internal scratch']
  %s0 = inlined_call_operand.hbm [shape: f32[8,32], index: 0, kind: input, shape index: {}]
  %s1 = inlined_call_operand.hbm [shape: f32[32,64], index: 1, kind: input, shape index: {}]
  %s2 = inlined_call_operand.vmem [shape: f32[1,64], index: 2, kind: input, shape index: {}]
  %s3 = inlined_call_operand.hbm [shape: f32[64,64], index: 3, kind: input, shape index: {}]
  %s4 = inlined_call_operand.vmem [shape: f32[1,64], index: 4, kind: input, shape index: {}]
  %s5 = inlined_call_operand.hbm [shape: f32[64,64], index: 5, kind: input, shape index: {}]
  %s6 = inlined_call_operand.vmem [shape: f32[1,64], index: 6, kind: input, shape index: {}]
  %s7 = inlined_call_operand.hbm [shape: f32[8,64], index: 7, kind: output, shape index: {}]
  %s8 = sld [smem:[#allocation0]]
  $region54: #{decoder_forward.1} parent=0
    _
  %s10 = ssub.s32 1, %s8
  %s11 = scalar_select 0, %s10, %s8
  $region1: #{decoder_forward.1} parent=0
    #allocation2 [shape = 'u8[4096]{0}', space=vmem, size = 0x1000, scoped, tag = 'input window, operand 0, single buffered']
    #allocation3 [shape = 's32[1]{0}', space=sflag, size = 0x4, scoped, tag = 'scoped memory for decoder_forward.1']
    #allocation4 [shape = 's32[1]{0}', space=sflag, size = 0x4, scoped, tag = 'scoped memory for decoder_forward.1']
    #allocation5 [shape = 'u8[16384]{0}', space=vmem, size = 0x4000, scoped, tag = 'input window, operand 1, single buffered']
    #allocation6 [shape = 's32[1]{0}', space=sflag, size = 0x4, scoped, tag = 'scoped memory for decoder_forward.1']
    #allocation7 [shape = 'u8[32768]{0}', space=vmem, size = 0x8000, scoped, tag = 'input window, operand 3, single buffered']
    #allocation8 [shape = 'u8[32768]{0}', space=vmem, size = 0x8000, scoped, tag = 'input window, operand 5, single buffered']
    #allocation9 [shape = 's32[1]{0}', space=sflag, size = 0x4, scoped, tag = 'scoped memory for decoder_forward.1']
    #allocation10 [shape = 'u8[4096]{0}', space=vmem, size = 0x1000, scoped, tag = 'output window, operand 0, single buffered']
    %12 = vsyncpa [#allocation3], 0
    %13 = vsyncpa [#allocation6], 0
    %14 = vsyncpa [#allocation9], 0
    %15 = vsyncpa [#allocation4], 0
    // Predicated region
    $region2: #{decoder_forward.1} parent=1 // pred_check
      _
    $region3: #{decoder_forward.1} parent=1 // pred_check_branch
      %17 = sbr.rel (0) target = $region5
    $region4: #{decoder_forward.1} parent=1 // pred_region
      %s19 = ssub.s32 128, 128
      %20 = vsyncadd [#allocation3], %s19
      %s22 = sshll.u32 [#allocation2], 4
      %s23 = int_to_ptr.vmem [resolvable:$true] %s22
      %25 = dma.hbm_to_vmem [thread:$0]  %s0, 128, %s23, [#allocation3]
    $region5: #{decoder_forward.1} parent=1 // pred_fallthru
      _
    // Predicated region
    $region6: #{decoder_forward.1} parent=1 // pred_check
      _
    $region7: #{decoder_forward.1} parent=1 // pred_check_branch
      %27 = sbr.rel (0) target = $region9
    $region8: #{decoder_forward.1} parent=1 // pred_region
      %s29 = ssub.s32 512, 512
      %30 = vsyncadd [#allocation6], %s29
      %s31 = sshll.u32 [#allocation5], 4
      %s32 = int_to_ptr.vmem [resolvable:$true] %s31
      %37 = dma.hbm_to_vmem [thread:$0]  %s1, 512, %s32, [#allocation6], 128, 128, 8
    $region9: #{decoder_forward.1} parent=1 // pred_fallthru
      _
    // Predicated region
    $region10: #{decoder_forward.1} parent=1 // pred_check
      _
    $region11: #{decoder_forward.1} parent=1 // pred_check_branch
      %39 = sbr.rel (0) target = $region13
    $region12: #{decoder_forward.1} parent=1 // pred_region
      _
    $region13: #{decoder_forward.1} parent=1 // pred_fallthru
      _
    // Predicated region
    $region14: #{decoder_forward.1} parent=1 // pred_check
      _
    $region15: #{decoder_forward.1} parent=1 // pred_check_branch
      %41 = sbr.rel (0) target = $region17
    $region16: #{decoder_forward.1} parent=1 // pred_region
      %s43 = ssub.s32 1024, 1024
      %44 = vsyncadd [#allocation6], %s43
      %s45 = sshll.u32 [#allocation7], 4
      %s46 = int_to_ptr.vmem [resolvable:$true] %s45
      %51 = dma.hbm_to_vmem [thread:$0]  %s3, 1024, %s46, [#allocation6], 128, 128, 8
    $region17: #{decoder_forward.1} parent=1 // pred_fallthru
      _
    // Predicated region
    $region18: #{decoder_forward.1} parent=1 // pred_check
      _
    $region19: #{decoder_forward.1} parent=1 // pred_check_branch
      %53 = sbr.rel (0) target = $region21
    $region20: #{decoder_forward.1} parent=1 // pred_region
      _
    $region21: #{decoder_forward.1} parent=1 // pred_fallthru
      _
    // Predicated region
    $region22: #{decoder_forward.1} parent=1 // pred_check
      _
    $region23: #{decoder_forward.1} parent=1 // pred_check_branch
      %55 = sbr.rel (0) target = $region25
    $region24: #{decoder_forward.1} parent=1 // pred_region
      %s57 = ssub.s32 1024, 1024
      %58 = vsyncadd [#allocation9], %s57
      %s59 = sshll.u32 [#allocation8], 4
      %s60 = int_to_ptr.vmem [resolvable:$true] %s59
      %65 = dma.hbm_to_vmem [thread:$0]  %s5, 1024, %s60, [#allocation9], 128, 128, 8
    $region25: #{decoder_forward.1} parent=1 // pred_fallthru
      _
    // Predicated region
    $region26: #{decoder_forward.1} parent=1 // pred_check
      _
    $region27: #{decoder_forward.1} parent=1 // pred_check_branch
      %67 = sbr.rel (0) target = $region29
    $region28: #{decoder_forward.1} parent=1 // pred_region
      _
    $region29: #{decoder_forward.1} parent=1 // pred_fallthru
      _
    // Predicated region
    $region30: #{decoder_forward.1} parent=1 // pred_check
      _
    $region31: #{decoder_forward.1} parent=1 // pred_check_branch
      %69 = sbr.rel (0) target = $region33
    $region32: #{decoder_forward.1} parent=1 // pred_region
      %70 = dma.done [#allocation3], 128
    $region33: #{decoder_forward.1} parent=1 // pred_fallthru
      _
    // Predicated region
    $region34: #{decoder_forward.1} parent=1 // pred_check
      _
    $region35: #{decoder_forward.1} parent=1 // pred_check_branch
      %72 = sbr.rel (0) target = $region37
    $region36: #{decoder_forward.1} parent=1 // pred_region
      %73 = dma.done [#allocation6], 512
    $region37: #{decoder_forward.1} parent=1 // pred_fallthru
      _
    // Predicated region
    $region38: #{decoder_forward.1} parent=1 // pred_check
      _
    $region39: #{decoder_forward.1} parent=1 // pred_check_branch
      %75 = sbr.rel (0) target = $region41
    $region40: #{decoder_forward.1} parent=1 // pred_region
      %76 = dma.done [#allocation6], 1024
    $region41: #{decoder_forward.1} parent=1 // pred_fallthru
      _
    // Predicated region
    $region42: #{decoder_forward.1} parent=1 // pred_check
      _
    $region43: #{decoder_forward.1} parent=1 // pred_check_branch
      %78 = sbr.rel (0) target = $region45
    $region44: #{decoder_forward.1} parent=1 // pred_region
      %79 = dma.done [#allocation9], 1024
    $region45: #{decoder_forward.1} parent=1 // pred_fallthru
      _
    %v80 = vld [vmem:[#allocation2] sm:$0xff]
    %v81 = vld [vmem:[#allocation5] sm:$0xff]
    %v82 = vld [vmem:[#allocation5 + $0x8] sm:$0xff]
    %v83 = vld [vmem:[#allocation5 + $0x10] sm:$0xff]
    %v84 = vld [vmem:[#allocation5 + $0x18] sm:$0xff]
    %v85 = vld [vmem:[%s2] sm:$0x1]
    %v87 = vlaneseq
    %v88 = vshrl.u32 %v87, 7
    %v89 = vsub.s32 0, %v88
    %v90 = vrot.slane %v85, %v89
    %vm92 = vcmask 261120
    %v94 = vsel %vm92, %v80, 0
    %96 = vmatprep.subr.mxu0 0.0
    %97 = vmatpush1.msra.mxu0 0.0
    %98 = vmatprep.subr.mxu0 0.0
    %99 = vmatpush1.msra.mxu0 0.0
    %100 = vmatprep.subr.mxu0 0.0
    %101 = vmatpush1.msra.mxu0 0.0
    %102 = vmatprep.subr.mxu0 0.0
    %103 = vmatpush1.msra.mxu0 0.0
    %104 = vmatprep.subr.mxu0 0.0
    %105 = vmatpush1.msra.mxu0 0.0
    %106 = vmatprep.subr.mxu0 0.0
    %107 = vmatpush1.msra.mxu0 0.0
    %108 = vmatprep.subr.mxu0 0.0
    %109 = vmatpush1.msra.mxu0 0.0
    %110 = vmatprep.subr.mxu0 0.0
    %111 = vmatpush1.msra.mxu0 0.0
    %112 = vmatprep.subr.mxu0 0.0
    %113 = vmatpush1.msra.mxu0 0.0
    %114 = vmatprep.subr.mxu0 0.0
    %115 = vmatpush1.msra.mxu0 0.0
    %116 = vmatprep.subr.mxu0 0.0
    %117 = vmatpush1.msra.mxu0 0.0
    %118 = vmatprep.subr.mxu0 0.0
    %119 = vmatpush1.msra.mxu0 0.0
    %120 = vmatprep.subr.mxu0 0.0
    %121 = vmatpush1.msra.mxu0 %v84
    %122 = vmatprep.subr.mxu0 0.0
    %123 = vmatpush1.msra.mxu0 %v83
    %124 = vmatprep.subr.mxu0 0.0
    %125 = vmatpush1.msra.mxu0 %v82
    %126 = vmatprep.subr.mxu0 0.0
    %127 = vmatpush1.msra.mxu0 %v81
    %128 = vmatprep.subr.mxu0 0.0
    %129 = vmatpush2.msra.mxu0 0.0
    %130 = vmatprep.subr.mxu0 0.0
    %131 = vmatpush2.msra.mxu0 0.0
    %132 = vmatprep.subr.mxu0 0.0
    %133 = vmatpush2.msra.mxu0 0.0
    %134 = vmatprep.subr.mxu0 0.0
    %135 = vmatpush2.msra.mxu0 0.0
    %136 = vmatprep.subr.mxu0 0.0
    %137 = vmatpush2.msra.mxu0 0.0
    %138 = vmatprep.subr.mxu0 0.0
    %139 = vmatpush2.msra.mxu0 0.0
    %140 = vmatprep.subr.mxu0 0.0
    %141 = vmatpush2.msra.mxu0 0.0
    %142 = vmatprep.subr.mxu0 0.0
    %143 = vmatpush2.msra.mxu0 0.0
    %144 = vmatprep.subr.mxu0 0.0
    %145 = vmatpush2.msra.mxu0 0.0
    %146 = vmatprep.subr.mxu0 0.0
    %147 = vmatpush2.msra.mxu0 0.0
    %148 = vmatprep.subr.mxu0 0.0
    %149 = vmatpush2.msra.mxu0 0.0
    %150 = vmatprep.subr.mxu0 0.0
    %151 = vmatpush2.msra.mxu0 0.0
    %152 = vmatprep.subr.mxu0 0.0
    %153 = vmatpush2.msra.mxu0 0.0
    %154 = vmatprep.subr.mxu0 0.0
    %155 = vmatpush2.msra.mxu0 0.0
    %156 = vmatprep.subr.mxu0 0.0
    %157 = vmatpush2.msra.mxu0 0.0
    %158 = vmatprep.subr.mxu0 0.0
    %159 = vmatpush2.msra.mxu0 0.0
    %160 = vmatprep.mubr.f32.mxu0 0.0
    %161 = vmatmul.mubr.f32.gmra.mxu0 %v94
    %v162 = vpop.f32.mrf.mxu0
    %v163 = vadd.f32 %v90, %v162
    %v164 = vpop.f32.mrf.mxu0
    %165 = vdwg.mxu0
    %v166 = vmul.f32 %v163, 0.01
    %v167 = vmax.f32 %v163, %v166
    %v168 = vld [vmem:[#allocation7] sm:$0xff]
    %v169 = vld [vmem:[#allocation7 + $0x8] sm:$0xff]
    %v170 = vld [vmem:[#allocation7 + $0x10] sm:$0xff]
    %v171 = vld [vmem:[#allocation7 + $0x18] sm:$0xff]
    %v172 = vld [vmem:[#allocation7 + $0x20] sm:$0xff]
    %v173 = vld [vmem:[#allocation7 + $0x28] sm:$0xff]
    %v174 = vld [vmem:[#allocation7 + $0x30] sm:$0xff]
    %v175 = vld [vmem:[#allocation7 + $0x38] sm:$0xff]
    %v176 = vld [vmem:[%s4] sm:$0x1]
    %v178 = vlaneseq
    %v179 = vshrl.u32 %v178, 7
    %v180 = vsub.s32 0, %v179
    %v181 = vrot.slane %v176, %v180
    %vm183 = vcmask 523264
    %v185 = vsel %vm183, %v167, 0
    %187 = vmatprep.subr.mxu0 0.0
    %188 = vmatpush1.msra.mxu0 0.0
    %189 = vmatprep.subr.mxu0 0.0
    %190 = vmatpush1.msra.mxu0 0.0
    %191 = vmatprep.subr.mxu0 0.0
    %192 = vmatpush1.msra.mxu0 0.0
    %193 = vmatprep.subr.mxu0 0.0
    %194 = vmatpush1.msra.mxu0 0.0
    %195 = vmatprep.subr.mxu0 0.0
    %196 = vmatpush1.msra.mxu0 0.0
    %197 = vmatprep.subr.mxu0 0.0
    %198 = vmatpush1.msra.mxu0 0.0
    %199 = vmatprep.subr.mxu0 0.0
    %200 = vmatpush1.msra.mxu0 0.0
    %201 = vmatprep.subr.mxu0 0.0
    %202 = vmatpush1.msra.mxu0 0.0
    %203 = vmatprep.subr.mxu0 0.0
    %204 = vmatpush1.msra.mxu0 %v175
    %205 = vmatprep.subr.mxu0 0.0
    %206 = vmatpush1.msra.mxu0 %v174
    %207 = vmatprep.subr.mxu0 0.0
    %208 = vmatpush1.msra.mxu0 %v173
    %209 = vmatprep.subr.mxu0 0.0
    %210 = vmatpush1.msra.mxu0 %v172
    %211 = vmatprep.subr.mxu0 0.0
    %212 = vmatpush1.msra.mxu0 %v171
    %213 = vmatprep.subr.mxu0 0.0
    %214 = vmatpush1.msra.mxu0 %v170
    %215 = vmatprep.subr.mxu0 0.0
    %216 = vmatpush1.msra.mxu0 %v169
    %217 = vmatprep.subr.mxu0 0.0
    %218 = vmatpush1.msra.mxu0 %v168
    %219 = vmatprep.subr.mxu0 0.0
    %220 = vmatpush2.msra.mxu0 0.0
    %221 = vmatprep.subr.mxu0 0.0
    %222 = vmatpush2.msra.mxu0 0.0
    %223 = vmatprep.subr.mxu0 0.0
    %224 = vmatpush2.msra.mxu0 0.0
    %225 = vmatprep.subr.mxu0 0.0
    %226 = vmatpush2.msra.mxu0 0.0
    %227 = vmatprep.subr.mxu0 0.0
    %228 = vmatpush2.msra.mxu0 0.0
    %229 = vmatprep.subr.mxu0 0.0
    %230 = vmatpush2.msra.mxu0 0.0
    %231 = vmatprep.subr.mxu0 0.0
    %232 = vmatpush2.msra.mxu0 0.0
    %233 = vmatprep.subr.mxu0 0.0
    %234 = vmatpush2.msra.mxu0 0.0
    %235 = vmatprep.subr.mxu0 0.0
    %236 = vmatpush2.msra.mxu0 0.0
    %237 = vmatprep.subr.mxu0 0.0
    %238 = vmatpush2.msra.mxu0 0.0
    %239 = vmatprep.subr.mxu0 0.0
    %240 = vmatpush2.msra.mxu0 0.0
    %241 = vmatprep.subr.mxu0 0.0
    %242 = vmatpush2.msra.mxu0 0.0
    %243 = vmatprep.subr.mxu0 0.0
    %244 = vmatpush2.msra.mxu0 0.0
    %245 = vmatprep.subr.mxu0 0.0
    %246 = vmatpush2.msra.mxu0 0.0
    %247 = vmatprep.subr.mxu0 0.0
    %248 = vmatpush2.msra.mxu0 0.0
    %249 = vmatprep.subr.mxu0 0.0
    %250 = vmatpush2.msra.mxu0 0.0
    %251 = vmatprep.mubr.f32.mxu0 0.0
    %252 = vmatmul.mubr.f32.gmra.mxu0 %v185
    %v253 = vpop.f32.mrf.mxu0
    %v254 = vadd.f32 %v181, %v253
    %v255 = vpop.f32.mrf.mxu0
    %256 = vdwg.mxu0
    %v257 = vmul.f32 %v254, 0.01
    %v258 = vmax.f32 %v254, %v257
    %v259 = vld [vmem:[#allocation8] sm:$0xff]
    %v260 = vld [vmem:[#allocation8 + $0x8] sm:$0xff]
    %v261 = vld [vmem:[#allocation8 + $0x10] sm:$0xff]
    %v262 = vld [vmem:[#allocation8 + $0x18] sm:$0xff]
    %v263 = vld [vmem:[#allocation8 + $0x20] sm:$0xff]
    %v264 = vld [vmem:[#allocation8 + $0x28] sm:$0xff]
    %v265 = vld [vmem:[#allocation8 + $0x30] sm:$0xff]
    %v266 = vld [vmem:[#allocation8 + $0x38] sm:$0xff]
    %v267 = vld [vmem:[%s6] sm:$0x1]
    %v269 = vlaneseq
    %v270 = vshrl.u32 %v269, 7
    %v271 = vsub.s32 0, %v270
    %v272 = vrot.slane %v267, %v271
    %v275 = vsel %vm183, %v258, 0
    %277 = vmatprep.subr.mxu0 0.0
    %278 = vmatpush1.msra.mxu0 0.0
    %279 = vmatprep.subr.mxu0 0.0
    %280 = vmatpush1.msra.mxu0 0.0
    %281 = vmatprep.subr.mxu0 0.0
    %282 = vmatpush1.msra.mxu0 0.0
    %283 = vmatprep.subr.mxu0 0.0
    %284 = vmatpush1.msra.mxu0 0.0
    %285 = vmatprep.subr.mxu0 0.0
    %286 = vmatpush1.msra.mxu0 0.0
    %287 = vmatprep.subr.mxu0 0.0
    %288 = vmatpush1.msra.mxu0 0.0
    %289 = vmatprep.subr.mxu0 0.0
    %290 = vmatpush1.msra.mxu0 0.0
    %291 = vmatprep.subr.mxu0 0.0
    %292 = vmatpush1.msra.mxu0 0.0
    %293 = vmatprep.subr.mxu0 0.0
    %294 = vmatpush1.msra.mxu0 %v266
    %295 = vmatprep.subr.mxu0 0.0
    %296 = vmatpush1.msra.mxu0 %v265
    %297 = vmatprep.subr.mxu0 0.0
    %298 = vmatpush1.msra.mxu0 %v264
    %299 = vmatprep.subr.mxu0 0.0
    %300 = vmatpush1.msra.mxu0 %v263
    %301 = vmatprep.subr.mxu0 0.0
    %302 = vmatpush1.msra.mxu0 %v262
    %303 = vmatprep.subr.mxu0 0.0
    %304 = vmatpush1.msra.mxu0 %v261
    %305 = vmatprep.subr.mxu0 0.0
    %306 = vmatpush1.msra.mxu0 %v260
    %307 = vmatprep.subr.mxu0 0.0
    %308 = vmatpush1.msra.mxu0 %v259
    %309 = vmatprep.subr.mxu0 0.0
    %310 = vmatpush2.msra.mxu0 0.0
    %311 = vmatprep.subr.mxu0 0.0
    %312 = vmatpush2.msra.mxu0 0.0
    %313 = vmatprep.subr.mxu0 0.0
    %314 = vmatpush2.msra.mxu0 0.0
    %315 = vmatprep.subr.mxu0 0.0
    %316 = vmatpush2.msra.mxu0 0.0
    %317 = vmatprep.subr.mxu0 0.0
    %318 = vmatpush2.msra.mxu0 0.0
    %319 = vmatprep.subr.mxu0 0.0
    %320 = vmatpush2.msra.mxu0 0.0
    %321 = vmatprep.subr.mxu0 0.0
    %322 = vmatpush2.msra.mxu0 0.0
    %323 = vmatprep.subr.mxu0 0.0
    %324 = vmatpush2.msra.mxu0 0.0
    %325 = vmatprep.subr.mxu0 0.0
    %326 = vmatpush2.msra.mxu0 0.0
    %327 = vmatprep.subr.mxu0 0.0
    %328 = vmatpush2.msra.mxu0 0.0
    %329 = vmatprep.subr.mxu0 0.0
    %330 = vmatpush2.msra.mxu0 0.0
    %331 = vmatprep.subr.mxu0 0.0
    %332 = vmatpush2.msra.mxu0 0.0
    %333 = vmatprep.subr.mxu0 0.0
    %334 = vmatpush2.msra.mxu0 0.0
    %335 = vmatprep.subr.mxu0 0.0
    %336 = vmatpush2.msra.mxu0 0.0
    %337 = vmatprep.subr.mxu0 0.0
    %338 = vmatpush2.msra.mxu0 0.0
    %339 = vmatprep.subr.mxu0 0.0
    %340 = vmatpush2.msra.mxu0 0.0
    %341 = vmatprep.mubr.f32.mxu0 0.0
    %342 = vmatmul.mubr.f32.gmra.mxu0 %v275
    %v343 = vpop.f32.mrf.mxu0
    %v344 = vadd.f32 %v272, %v343
    %v345 = vpop.f32.mrf.mxu0
    %346 = vdwg.mxu0
    %347 = vst.msk [vmem:[#allocation10] sm:$0xff] %vm183, %v344
    // Predicated region
    $region46: #{decoder_forward.1} parent=1 // pred_check
      _
    $region47: #{decoder_forward.1} parent=1 // pred_check_branch
      %349 = sbr.rel (0) target = $region49
    $region48: #{decoder_forward.1} parent=1 // pred_region
      %s351 = ssub.s32 128, 128
      %352 = vsyncadd [#allocation4], %s351
      %s354 = sshll.u32 [#allocation10], 4
      %s355 = int_to_ptr.vmem [resolvable:$true] %s354
      %357 = dma.vmem_to_hbm [thread:$0]  %s355, 128, %s7, [#allocation4]
    $region49: #{decoder_forward.1} parent=1 // pred_fallthru
      _
    // Predicated region
    $region50: #{decoder_forward.1} parent=1 // pred_check
      _
    $region51: #{decoder_forward.1} parent=1 // pred_check_branch
      %359 = sbr.rel (0) target = $region53
    $region52: #{decoder_forward.1} parent=1 // pred_region
      %360 = dma.done [#allocation4], 128
    $region53: #{decoder_forward.1} parent=1 // pred_fallthru
      _
    %361 = vsyncpa [#allocation3], 1
    %362 = vsyncpa [#allocation6], 1
    %363 = vsyncpa [#allocation9], 1
    %364 = vsyncpa [#allocation4], 1

</llo_original>
